<compile_context>
chip_gen: v5e
topology: v5e:2x2
jax: 0.10.0
libtpu: 0.0.40
codegen_flags: <defaults>
</compile_context>

<pallas_src>
import functools

import jax
import jax.numpy as jnp
from jax.experimental import pallas as pl
from jax.experimental.pallas import tpu as pltpu

LANE = 128          # TPU lane width (last dim)
BF16_SUBLANE = 16   # bf16 packs 16 rows per vreg -> batch-tile quantum
DEFAULT_BLOCK_B = 1024   # sweep 1024-2048 on v5e/v6e; keep ~1024 on v7x (64 MiB VMEM)


def _round_up(x, m):
    return (x + m - 1) // m * m


def _pad_axis_to(x, axis, target):
    """Zero-pad `axis` of x up to `target` (no-op if already there)."""
    pad = target - x.shape[axis]
    if pad <= 0:
        return x
    widths = [(0, 0)] * x.ndim
    widths[axis] = (0, pad)
    return jnp.pad(x, widths)


def _pad_axis_to_multiple(x, axis, m):
    return _pad_axis_to(x, axis, _round_up(x.shape[axis], m))


@functools.lru_cache(maxsize=None)
def _vmem_limit_bytes():
    """~3/4 of physical VMEM: ~96 MiB on v5e/v6e (128 MiB), ~48 MiB on v7x (64 MiB)."""
    cap = 64 * 1024 * 1024  # conservative fallback (safe on every generation)
    try:
        cap = int(pltpu.get_tpu_info().vmem_capacity_bytes)
    except Exception:
        pass
    return (cap * 3) // 4


# --------------------------------------------------------------------------
# One-time parameter preparation (do NOT call per forward pass).
# --------------------------------------------------------------------------
def prepare_params(params):
    """Cast weights to bf16 and zero-pad hidden/action dims to 128 lanes.

    Call once (outside the rollout / training loop) and reuse the result:
    this removes the per-call weight cast+pad HBM passes entirely.
    Zero padding keeps the math exact for the unpadded outputs.
    """
    w1 = _pad_axis_to_multiple(jnp.asarray(params["w1"], jnp.bfloat16), 1, LANE)
    b1 = _pad_axis_to_multiple(
        jnp.asarray(params["b1"], jnp.float32).reshape(1, -1), 1, LANE)
    w2 = _pad_axis_to_multiple(
        _pad_axis_to_multiple(jnp.asarray(params["w2"], jnp.bfloat16), 0, LANE), 1, LANE)
    b2 = _pad_axis_to_multiple(
        jnp.asarray(params["b2"], jnp.float32).reshape(1, -1), 1, LANE)
    w3 = _pad_axis_to_multiple(
        _pad_axis_to_multiple(jnp.asarray(params["w3"], jnp.bfloat16), 0, LANE), 1, LANE)
    b3 = _pad_axis_to_multiple(
        jnp.asarray(params["b3"], jnp.float32).reshape(1, -1), 1, LANE)
    prepared = {"w1": w1, "b1": b1, "w2": w2, "b2": b2, "w3": w3, "b3": b3}
    if "log_std" in params:
        prepared["log_std"] = jnp.asarray(params["log_std"], jnp.float32)
    return prepared


# --------------------------------------------------------------------------
# Kernel: fused 3-layer MLP on one (TB, obs_dim) batch tile.
# --------------------------------------------------------------------------
def _policy_mlp_kernel(obs_ref, w1_ref, b1_ref, w2_ref, b2_ref, w3_ref, b3_ref,
                       out_ref):
    # obs lives in HBM as f32; cast to bf16 here (no separate XLA cast pass,
    # obs is read from HBM exactly once).  Dots accumulate in f32 on the MXU;
    # biases/ReLU stay f32.
    x = obs_ref[...].astype(jnp.bfloat16)
    h = jnp.dot(x, w1_ref[...], preferred_element_type=jnp.float32) + b1_ref[...]
    h = jnp.maximum(h, 0.0).astype(jnp.bfloat16)
    h = jnp.dot(h, w2_ref[...], preferred_element_type=jnp.float32) + b2_ref[...]
    h = jnp.maximum(h, 0.0).astype(jnp.bfloat16)
    out = jnp.dot(h, w3_ref[...], preferred_element_type=jnp.float32) + b3_ref[...]
    out_ref[...] = out.astype(out_ref.dtype)
    # TODO(synk): if profiling shows the kernel MXU-bound at large hidden dims on
    # v6e, int8 weight quantization (per-channel scales absorbed in the epilogue)
    # would double MXU rate; skipped here (v7x has no int MXU).


# --------------------------------------------------------------------------
# Forward pass wrapper.
# --------------------------------------------------------------------------
@functools.partial(jax.jit,
                   static_argnames=("action_dim", "action_type", "block_b",
                                    "out_dtype"))
def shared_policy_forward(obs, prepared, *, action_dim, action_type="discrete",
                          block_b=DEFAULT_BLOCK_B, out_dtype=jnp.float32):
    """Pallas-backed forward pass of SharedPolicyNetwork.

    obs:      (B, obs_dim) float32
    prepared: output of prepare_params() (pre-padded bf16 weights, f32 biases,
              optional log_std).
    """
    B, obs_dim = obs.shape
    w1, b1 = prepared["w1"], prepared["b1"]
    w2, b2 = prepared["w2"], prepared["b2"]
    w3, b3 = prepared["w3"], prepared["b3"]
    h_pad = w1.shape[1]
    a_pad = w3.shape[1]

    # ---- Batch tiling: adaptive tile size, 16-row quantum, bounded padding. ----
    num_tiles = pl.cdiv(B, block_b)
    if B >= 2 * BF16_SUBLANE:
        # Make sure the 'parallel' batch axis has >=2 steps so both TensorCores
        # get work on v7x (negligible extra step cost on 1-TC v5e/v6e).
        num_tiles = max(num_tiles, 2)
    tb = _round_up(pl.cdiv(B, num_tiles), BF16_SUBLANE)
    b_pad = num_tiles * tb
    obs_p = _pad_axis_to(obs, 0, b_pad)      # pad rows only; no dtype pre-pass
    grid = (num_tiles,)

    def resident(shape):
        # Whole-array block with a constant index_map: fetched once, stays
        # resident in VMEM across all grid steps (no re-DMA).
        # TODO(synk): on v7x with very large hidden dims, add
        # pipeline_mode=pl.Buffered(1) here to drop the second (unused) weight
        # buffer and halve the resident-weight VMEM footprint.
        return pl.BlockSpec(shape, lambda i: (0, 0))

    out_padded = pl.pallas_call(
        _policy_mlp_kernel,
        out_shape=jax.ShapeDtypeStruct((b_pad, a_pad), out_dtype),
        grid=grid,
        in_specs=[
            pl.BlockSpec((tb, obs_dim), lambda i: (i, 0)),      # obs tile (pipelined)
            resident((obs_dim, h_pad)), resident((1, h_pad)),   # w1, b1
            resident((h_pad, h_pad)), resident((1, h_pad)),     # w2, b2
            resident((h_pad, a_pad)), resident((1, a_pad)),     # w3, b3
        ],
        out_specs=pl.BlockSpec((tb, a_pad), lambda i: (i, 0)),
        compiler_params=pltpu.CompilerParams(
            dimension_semantics=("parallel",),       # shards batch across TCs on v7x
            vmem_limit_bytes=_vmem_limit_bytes()),   # generation-aware VMEM budget
    )(obs_p, w1, b1, w2, b2, w3, b3)

    logits = out_padded[:B, :action_dim]

    if action_type == "discrete":
        return logits
    # Continuous: action_mean = logits, action_std = exp(log_std) expanded.
    action_std = jnp.broadcast_to(
        jnp.exp(prepared["log_std"]).astype(logits.dtype), logits.shape)
    return logits, action_std


# --------------------------------------------------------------------------
# Synthetic init + pure-JAX reference (same bf16-weight / f32-accum recipe).
# --------------------------------------------------------------------------
def init_params(key, obs_dim, action_dim, hidden_dim, action_type="discrete"):
    """Deterministic synthetic init (PyTorch-Linear-like uniform ranges)."""
    ks = jax.random.split(key, 6)

    def linear(kw, kb, fan_in, fan_out):
        bound = 1.0 / jnp.sqrt(jnp.float32(fan_in))
        w = jax.random.uniform(kw, (fan_in, fan_out), jnp.float32, -bound, bound)
        b = jax.random.uniform(kb, (fan_out,), jnp.float32, -bound, bound)
        return w, b

    w1, b1 = linear(ks[0], ks[1], obs_dim, hidden_dim)
    w2, b2 = linear(ks[2], ks[3], hidden_dim, hidden_dim)
    w3, b3 = linear(ks[4], ks[5], hidden_dim, action_dim)
    params = {"w1": w1, "b1": b1, "w2": w2, "b2": b2, "w3": w3, "b3": b3}
    if action_type != "discrete":
        params["log_std"] = jnp.zeros((action_dim,), jnp.float32)
    return params


def _reference_forward(obs, params, action_type="discrete"):
    x = obs.astype(jnp.bfloat16)
    h = jnp.dot(x, params["w1"].astype(jnp.bfloat16),
                preferred_element_type=jnp.float32) + params["b1"]
    h = jnp.maximum(h, 0.0).astype(jnp.bfloat16)
    h = jnp.dot(h, params["w2"].astype(jnp.bfloat16),
                preferred_element_type=jnp.float32) + params["b2"]
    h = jnp.maximum(h, 0.0).astype(jnp.bfloat16)
    out = jnp.dot(h, params["w3"].astype(jnp.bfloat16),
                  preferred_element_type=jnp.float32) + params["b3"]
    if action_type == "discrete":
        return out
    return out, jnp.broadcast_to(jnp.exp(params["log_std"]), out.shape)


if __name__ == "__main__":
    key = jax.random.PRNGKey(0)
    k_obs, k_obs2, k_params = jax.random.split(key, 3)

    B, OBS_DIM, ACTION_DIM, HIDDEN_DIM = 8, 16, 6, 32
    obs = jax.random.normal(k_obs, (B, OBS_DIM), jnp.float32)

    # ---- Discrete policy ----
    params_d = init_params(k_params, OBS_DIM, ACTION_DIM, HIDDEN_DIM, "discrete")
    prep_d = prepare_params(params_d)          # one-time weight cast/pad
    logits = shared_policy_forward(obs, prep_d, action_dim=ACTION_DIM,
                                   action_type="discrete")
    logits = jax.block_until_ready(logits)
    ref_logits = _reference_forward(obs, params_d, "discrete")
    assert logits.shape == (B, ACTION_DIM)
    assert jnp.allclose(logits, ref_logits, atol=1e-3, rtol=1e-3)

    # ---- Optional bf16 output path (halved padded writeback) ----
    logits_bf16 = shared_policy_forward(obs, prep_d, action_dim=ACTION_DIM,
                                        action_type="discrete",
                                        out_dtype=jnp.bfloat16)
    logits_bf16 = jax.block_until_ready(logits_bf16)
    assert logits_bf16.dtype == jnp.bfloat16
    assert jnp.allclose(logits_bf16.astype(jnp.float32), ref_logits,
                        atol=3e-2, rtol=3e-2)

    # ---- Continuous policy ----
    params_c = init_params(k_params, OBS_DIM, ACTION_DIM, HIDDEN_DIM, "continuous")
    prep_c = prepare_params(params_c)
    mean, std = shared_policy_forward(obs, prep_c, action_dim=ACTION_DIM,
                                      action_type="continuous")
    mean = jax.block_until_ready(mean)
    std = jax.block_until_ready(std)
    ref_mean, ref_std = _reference_forward(obs, params_c, "continuous")
    assert jnp.allclose(mean, ref_mean, atol=1e-3, rtol=1e-3)
    assert jnp.allclose(std, ref_std, atol=1e-6)

    # ---- Ragged batch (exercises multi-step grid + bounded padding path) ----
    B2 = 44
    obs2 = jax.random.normal(k_obs2, (B2, OBS_DIM), jnp.float32)
    logits2 = shared_policy_forward(obs2, prep_d, action_dim=ACTION_DIM,
                                    action_type="discrete", block_b=16)
    logits2 = jax.block_until_ready(logits2)
    ref_logits2 = _reference_forward(obs2, params_d, "discrete")
    assert logits2.shape == (B2, ACTION_DIM)
    assert jnp.allclose(logits2, ref_logits2, atol=1e-3, rtol=1e-3)

    print("KERNEL_OK")
</pallas_src>

<mosaic_0001>
module attributes {stable_mosaic.version = 11 : i64} {
  func.func @_policy_mlp_kernel(%arg0: i32, %arg1: memref<16x16xf32, #tpu.memory_space<vmem>>, %arg2: memref<16x128xbf16, #tpu.memory_space<vmem>>, %arg3: memref<1x128xf32, #tpu.memory_space<vmem>>, %arg4: memref<128x128xbf16, #tpu.memory_space<vmem>>, %arg5: memref<1x128xf32, #tpu.memory_space<vmem>>, %arg6: memref<128x128xbf16, #tpu.memory_space<vmem>>, %arg7: memref<1x128xf32, #tpu.memory_space<vmem>>, %arg8: memref<16x128xf32, #tpu.memory_space<vmem>>) attributes {dimension_semantics = [#tpu.dimension_semantics<parallel>], iteration_bounds = array<i64: 1>, scalar_prefetch = 0 : i64, scratch_operands = 0 : i64, tpu.core_type = #tpu.core_type<tc>, window_params = [{transform_indices = @transform_0, window_bounds = array<i64: 16, 16>}, {pipeline_mode = #tpu.pipeline_mode<synchronous>, transform_indices = @transform_1, window_bounds = array<i64: 16, 128>}, {pipeline_mode = #tpu.pipeline_mode<synchronous>, transform_indices = @transform_2, window_bounds = array<i64: 1, 128>}, {pipeline_mode = #tpu.pipeline_mode<synchronous>, transform_indices = @transform_3, window_bounds = array<i64: 128, 128>}, {pipeline_mode = #tpu.pipeline_mode<synchronous>, transform_indices = @transform_4, window_bounds = array<i64: 1, 128>}, {pipeline_mode = #tpu.pipeline_mode<synchronous>, transform_indices = @transform_5, window_bounds = array<i64: 128, 128>}, {pipeline_mode = #tpu.pipeline_mode<synchronous>, transform_indices = @transform_6, window_bounds = array<i64: 1, 128>}, {transform_indices = @transform_7, window_bounds = array<i64: 16, 128>}]} {
    %c0 = arith.constant 0 : index
    %c0_0 = arith.constant 0 : index
    %0 = vector.load %arg1[%c0, %c0_0] : memref<16x16xf32, #tpu.memory_space<vmem>>, vector<16x16xf32>
    %1 = arith.truncf %0 : vector<16x16xf32> to vector<16x16xbf16>
    %c0_1 = arith.constant 0 : index
    %c0_2 = arith.constant 0 : index
    %2 = vector.load %arg2[%c0_1, %c0_2] : memref<16x128xbf16, #tpu.memory_space<vmem>>, vector<16x128xbf16>
    %cst = arith.constant dense<0.000000e+00> : vector<16x128xf32>
    %3 = tpu.matmul %1, %2, %cst {dimension_numbers = #tpu.dot_dimension_numbers<[1], [0], [0], [1], [0, 0, 1, 1], [], []>} : vector<16x16xbf16>, vector<16x128xbf16>, vector<16x128xf32> -> vector<16x128xf32>
    %c0_3 = arith.constant 0 : index
    %c0_4 = arith.constant 0 : index
    %4 = vector.load %arg3[%c0_3, %c0_4] : memref<1x128xf32, #tpu.memory_space<vmem>>, vector<1x128xf32>
    %5 = vector.broadcast %4 : vector<1x128xf32> to vector<16x128xf32>
    %6 = arith.addf %3, %5 : vector<16x128xf32>
    %cst_5 = arith.constant 0.000000e+00 : f32
    %7 = vector.broadcast %cst_5 : f32 to vector<16x128xf32>
    %8 = arith.maximumf %6, %7 : vector<16x128xf32>
    %9 = arith.truncf %8 : vector<16x128xf32> to vector<16x128xbf16>
    %c0_6 = arith.constant 0 : index
    %c0_7 = arith.constant 0 : index
    %10 = vector.load %arg4[%c0_6, %c0_7] : memref<128x128xbf16, #tpu.memory_space<vmem>>, vector<128x128xbf16>
    %cst_8 = arith.constant dense<0.000000e+00> : vector<16x128xf32>
    %11 = tpu.matmul %9, %10, %cst_8 {dimension_numbers = #tpu.dot_dimension_numbers<[1], [0], [0], [1], [0, 0, 1, 1], [], []>} : vector<16x128xbf16>, vector<128x128xbf16>, vector<16x128xf32> -> vector<16x128xf32>
    %c0_9 = arith.constant 0 : index
    %c0_10 = arith.constant 0 : index
    %12 = vector.load %arg5[%c0_9, %c0_10] : memref<1x128xf32, #tpu.memory_space<vmem>>, vector<1x128xf32>
    %13 = vector.broadcast %12 : vector<1x128xf32> to vector<16x128xf32>
    %14 = arith.addf %11, %13 : vector<16x128xf32>
    %cst_11 = arith.constant 0.000000e+00 : f32
    %15 = vector.broadcast %cst_11 : f32 to vector<16x128xf32>
    %16 = arith.maximumf %14, %15 : vector<16x128xf32>
    %17 = arith.truncf %16 : vector<16x128xf32> to vector<16x128xbf16>
    %c0_12 = arith.constant 0 : index
    %c0_13 = arith.constant 0 : index
    %18 = vector.load %arg6[%c0_12, %c0_13] : memref<128x128xbf16, #tpu.memory_space<vmem>>, vector<128x128xbf16>
    %cst_14 = arith.constant dense<0.000000e+00> : vector<16x128xf32>
    %19 = tpu.matmul %17, %18, %cst_14 {dimension_numbers = #tpu.dot_dimension_numbers<[1], [0], [0], [1], [0, 0, 1, 1], [], []>} : vector<16x128xbf16>, vector<128x128xbf16>, vector<16x128xf32> -> vector<16x128xf32>
    %c0_15 = arith.constant 0 : index
    %c0_16 = arith.constant 0 : index
    %20 = vector.load %arg7[%c0_15, %c0_16] : memref<1x128xf32, #tpu.memory_space<vmem>>, vector<1x128xf32>
    %21 = vector.broadcast %20 : vector<1x128xf32> to vector<16x128xf32>
    %22 = arith.addf %19, %21 : vector<16x128xf32>
    %c0_17 = arith.constant 0 : index
    %c0_18 = arith.constant 0 : index
    %23 = vector.load %arg8[%c0_17, %c0_18] : memref<16x128xf32, #tpu.memory_space<vmem>>, vector<16x128xf32>
    tpu.vector_store %arg8[%c0_17, %c0_18], %22 {strides = array<i32>} : memref<16x128xf32, #tpu.memory_space<vmem>>, vector<16x128xf32>,
    return
  }
  func.func @transform_0(%arg0: i32) -> (i32, i32) {
    %c0_i32 = arith.constant 0 : i32
    %c0_i32_0 = arith.constant 0 : i32
    return %arg0, %c0_i32 : i32, i32
  }
  func.func @transform_1(%arg0: i32) -> (i32, i32) {
    %c0_i32 = arith.constant 0 : i32
    %c0_i32_0 = arith.constant 0 : i32
    %c0_i32_1 = arith.constant 0 : i32
    return %c0_i32, %c0_i32_0 : i32, i32
  }
  func.func @transform_2(%arg0: i32) -> (i32, i32) {
    %c0_i32 = arith.constant 0 : i32
    %c0_i32_0 = arith.constant 0 : i32
    %c0_i32_1 = arith.constant 0 : i32
    return %c0_i32, %c0_i32_0 : i32, i32
  }
  func.func @transform_3(%arg0: i32) -> (i32, i32) {
    %c0_i32 = arith.constant 0 : i32
    %c0_i32_0 = arith.constant 0 : i32
    %c0_i32_1 = arith.constant 0 : i32
    return %c0_i32, %c0_i32_0 : i32, i32
  }
  func.func @transform_4(%arg0: i32) -> (i32, i32) {
    %c0_i32 = arith.constant 0 : i32
    %c0_i32_0 = arith.constant 0 : i32
    %c0_i32_1 = arith.constant 0 : i32
    return %c0_i32, %c0_i32_0 : i32, i32
  }
  func.func @transform_5(%arg0: i32) -> (i32, i32) {
    %c0_i32 = arith.constant 0 : i32
    %c0_i32_0 = arith.constant 0 : i32
    %c0_i32_1 = arith.constant 0 : i32
    return %c0_i32, %c0_i32_0 : i32, i32
  }
  func.func @transform_6(%arg0: i32) -> (i32, i32) {
    %c0_i32 = arith.constant 0 : i32
    %c0_i32_0 = arith.constant 0 : i32
    %c0_i32_1 = arith.constant 0 : i32
    return %c0_i32, %c0_i32_0 : i32, i32
  }
  func.func @transform_7(%arg0: i32) -> (i32, i32) {
    %c0_i32 = arith.constant 0 : i32
    %c0_i32_0 = arith.constant 0 : i32
    return %arg0, %c0_i32 : i32, i32
  }
}

</mosaic_0001>

<llo_original>
// kernel: shared_policy_forward.1
$region0: #{shared_policy_forward.1}
  #allocation0 [shape = 'u32[]', space=smem, size = 0x4, offset = 0x4, fixed_abs, tag = 'smem constant byte address 0x4 - core index']
  #allocation1 [shape = 'u32[72,128]{1,0:T(1,128)}', space=vmem, size = 0x9000, scoped, tag = 'internal scratch']
  %s0 = inlined_call_operand.vmem [shape: f32[16,16], index: 0, kind: input, shape index: {}]
  %s1 = inlined_call_operand.vmem [shape: bf16[16,128], index: 1, kind: input, shape index: {}]
  %s2 = inlined_call_operand.vmem [shape: f32[1,128], index: 2, kind: input, shape index: {}]
  %s3 = inlined_call_operand.hbm [shape: bf16[128,128], index: 3, kind: input, shape index: {}]
  %s4 = inlined_call_operand.vmem [shape: f32[1,128], index: 4, kind: input, shape index: {}]
  %s5 = inlined_call_operand.hbm [shape: bf16[128,128], index: 5, kind: input, shape index: {}]
  %s6 = inlined_call_operand.vmem [shape: f32[1,128], index: 6, kind: input, shape index: {}]
  %s7 = inlined_call_operand.vmem [shape: f32[16,128], index: 7, kind: output, shape index: {}]
  %s8 = sld [smem:[#allocation0]]
  $region46: #{shared_policy_forward.1} parent=0
    _
  %s10 = ssub.s32 1, %s8
  %s11 = scalar_select 0, %s10, %s8
  $region1: #{shared_policy_forward.1} parent=0
    #allocation2 [shape = 'u8[32768]{0}', space=vmem, size = 0x8000, scoped, tag = 'input window, operand 3, single buffered']
    #allocation3 [shape = 's32[1]{0}', space=sflag, size = 0x4, scoped, tag = 'scoped memory for shared_policy_forward.1']
    #allocation4 [shape = 'u8[32768]{0}', space=vmem, size = 0x8000, scoped, tag = 'input window, operand 5, single buffered']
    #allocation5 [shape = 's32[1]{0}', space=sflag, size = 0x4, scoped, tag = 'scoped memory for shared_policy_forward.1']
    %12 = vsyncpa [#allocation3], 0
    %13 = vsyncpa [#allocation5], 0
    // Predicated region
    $region2: #{shared_policy_forward.1} parent=1 // pred_check
      _
    $region3: #{shared_policy_forward.1} parent=1 // pred_check_branch
      %15 = sbr.rel (0) target = $region5
    $region4: #{shared_policy_forward.1} parent=1 // pred_region
      _
    $region5: #{shared_policy_forward.1} parent=1 // pred_fallthru
      _
    // Predicated region
    $region6: #{shared_policy_forward.1} parent=1 // pred_check
      _
    $region7: #{shared_policy_forward.1} parent=1 // pred_check_branch
      %17 = sbr.rel (0) target = $region9
    $region8: #{shared_policy_forward.1} parent=1 // pred_region
      _
    $region9: #{shared_policy_forward.1} parent=1 // pred_fallthru
      _
    // Predicated region
    $region10: #{shared_policy_forward.1} parent=1 // pred_check
      _
    $region11: #{shared_policy_forward.1} parent=1 // pred_check_branch
      %19 = sbr.rel (0) target = $region13
    $region12: #{shared_policy_forward.1} parent=1 // pred_region
      _
    $region13: #{shared_policy_forward.1} parent=1 // pred_fallthru
      _
    // Predicated region
    $region14: #{shared_policy_forward.1} parent=1 // pred_check
      _
    $region15: #{shared_policy_forward.1} parent=1 // pred_check_branch
      %21 = sbr.rel (0) target = $region17
    $region16: #{shared_policy_forward.1} parent=1 // pred_region
      %23 = vsyncadd [#allocation3], 0
      %s24 = sshll.u32 %s3, 4
      %s25 = int_to_ptr.hbm [resolvable:$true] %s24
      %s26 = sshll.u32 [#allocation2], 4
      %s27 = int_to_ptr.vmem [resolvable:$true] %s26
      %32 = dma.hbm_to_vmem [thread:$0]  %s25, 1024, %s27, [#allocation3], 64, 64, 4
    $region17: #{shared_policy_forward.1} parent=1 // pred_fallthru
      _
    // Predicated region
    $region18: #{shared_policy_forward.1} parent=1 // pred_check
      _
    $region19: #{shared_policy_forward.1} parent=1 // pred_check_branch
      %34 = sbr.rel (0) target = $region21
    $region20: #{shared_policy_forward.1} parent=1 // pred_region
      _
    $region21: #{shared_policy_forward.1} parent=1 // pred_fallthru
      _
    // Predicated region
    $region22: #{shared_policy_forward.1} parent=1 // pred_check
      _
    $region23: #{shared_policy_forward.1} parent=1 // pred_check_branch
      %36 = sbr.rel (0) target = $region25
    $region24: #{shared_policy_forward.1} parent=1 // pred_region
      %38 = vsyncadd [#allocation5], 0
      %s39 = sshll.u32 %s5, 4
      %s40 = int_to_ptr.hbm [resolvable:$true] %s39
      %s41 = sshll.u32 [#allocation4], 4
      %s42 = int_to_ptr.vmem [resolvable:$true] %s41
      %47 = dma.hbm_to_vmem [thread:$0]  %s40, 1024, %s42, [#allocation5], 64, 64, 4
    $region25: #{shared_policy_forward.1} parent=1 // pred_fallthru
      _
    // Predicated region
    $region26: #{shared_policy_forward.1} parent=1 // pred_check
      _
    $region27: #{shared_policy_forward.1} parent=1 // pred_check_branch
      %49 = sbr.rel (0) target = $region29
    $region28: #{shared_policy_forward.1} parent=1 // pred_region
      _
    $region29: #{shared_policy_forward.1} parent=1 // pred_fallthru
      _
    // Predicated region
    $region30: #{shared_policy_forward.1} parent=1 // pred_check
      _
    $region31: #{shared_policy_forward.1} parent=1 // pred_check_branch
      %51 = sbr.rel (0) target = $region33
    $region32: #{shared_policy_forward.1} parent=1 // pred_region
      %53 = dma.done [#allocation3], 1024
    $region33: #{shared_policy_forward.1} parent=1 // pred_fallthru
      _
    // Predicated region
    $region34: #{shared_policy_forward.1} parent=1 // pred_check
      _
    $region35: #{shared_policy_forward.1} parent=1 // pred_check_branch
      %55 = sbr.rel (0) target = $region37
    $region36: #{shared_policy_forward.1} parent=1 // pred_region
      %57 = dma.done [#allocation5], 1024
    $region37: #{shared_policy_forward.1} parent=1 // pred_fallthru
      _
    %v59 = vld [vmem:[%s0] sm:$0xff]
    %v60 = vld [vmem:[%s0 + $0x8] sm:$0xff]
    %v61 = vpack.c.bf16 %v60, %v59
    %v62 = vld [vmem:[%s1] sm:$0xf]
    %v63 = vld [vmem:[%s1 + $0x4] sm:$0xf]
    %v64 = vld [vmem:[%s2] sm:$0x1]
    %v66 = vperm.slane %v64, 0
    %v70 = vunpack.c.l.b16 %v62
    %v71 = vunpack.c.l.b16 %v63
    %v72 = vpack.c.b16 %v71, %v70
    %vm74 = vcmask 130048
    %v76 = vsel %vm74, %v61, 0
    %78 = vmatpush.bf16.msra.mxu0 0
    %79 = vmatpush.bf16.msra.mxu0 0
    %80 = vmatpush.bf16.msra.mxu0 0
    %81 = vmatpush.bf16.msra.mxu0 0
    %82 = vmatpush.bf16.msra.mxu0 0
    %83 = vmatpush.bf16.msra.mxu0 0
    %84 = vmatpush.bf16.msra.mxu0 0
    %85 = vmatpush.bf16.msra.mxu0 %v72
    %86 = vmatmul.bf16.gmra.mxu0 %v76
    %v87 = vpop.f32.mrf.mxu0
    %v88 = vadd.f32 %v66, %v87
    %v89 = vpop.f32.mrf.mxu0
    %v90 = vadd.f32 %v66, %v89
    %91 = vdwg.mxu0
    %v92 = vmax.f32 %v88, 0.0
    %v93 = vmax.f32 %v90, 0.0
    %v94 = vpack.c.bf16 %v93, %v92
    %v95 = vld [vmem:[#allocation2] sm:$0xf]
    %v96 = vld [vmem:[#allocation2 + $0x4] sm:$0xf]
    %v97 = vld [vmem:[#allocation2 + $0x8] sm:$0xf]
    %v98 = vld [vmem:[#allocation2 + $0xc] sm:$0xf]
    %v99 = vld [vmem:[#allocation2 + $0x10] sm:$0xf]
    %v100 = vld [vmem:[#allocation2 + $0x14] sm:$0xf]
    %v101 = vld [vmem:[#allocation2 + $0x18] sm:$0xf]
    %v102 = vld [vmem:[#allocation2 + $0x1c] sm:$0xf]
    %v103 = vld [vmem:[#allocation2 + $0x20] sm:$0xf]
    %v104 = vld [vmem:[#allocation2 + $0x24] sm:$0xf]
    %v105 = vld [vmem:[#allocation2 + $0x28] sm:$0xf]
    %v106 = vld [vmem:[#allocation2 + $0x2c] sm:$0xf]
    %v107 = vld [vmem:[#allocation2 + $0x30] sm:$0xf]
    %v108 = vld [vmem:[#allocation2 + $0x34] sm:$0xf]
    %v109 = vld [vmem:[#allocation2 + $0x38] sm:$0xf]
    %v110 = vld [vmem:[#allocation2 + $0x3c] sm:$0xf]
    %v111 = vld [vmem:[%s4] sm:$0x1]
    %v113 = vperm.slane %v111, 0
    %v131 = vunpack.c.l.b16 %v95
    %v132 = vunpack.c.l.b16 %v96
    %v133 = vunpack.c.l.b16 %v97
    %v134 = vunpack.c.l.b16 %v98
    %v135 = vunpack.c.l.b16 %v99
    %v136 = vunpack.c.l.b16 %v100
    %v137 = vunpack.c.l.b16 %v101
    %v138 = vunpack.c.l.b16 %v102
    %v139 = vunpack.c.l.b16 %v103
    %v140 = vunpack.c.l.b16 %v104
    %v141 = vunpack.c.l.b16 %v105
    %v142 = vunpack.c.l.b16 %v106
    %v143 = vunpack.c.l.b16 %v107
    %v144 = vunpack.c.l.b16 %v108
    %v145 = vunpack.c.l.b16 %v109
    %v146 = vunpack.c.l.b16 %v110
    %v147 = vpack.c.b16 %v132, %v131
    %v148 = vpack.c.b16 %v134, %v133
    %v149 = vpack.c.b16 %v136, %v135
    %v150 = vpack.c.b16 %v138, %v137
    %v151 = vpack.c.b16 %v140, %v139
    %v152 = vpack.c.b16 %v142, %v141
    %v153 = vpack.c.b16 %v144, %v143
    %v154 = vpack.c.b16 %v146, %v145
    %163 = vmatpush.bf16.msra.mxu0 %v154
    %164 = vmatpush.bf16.msra.mxu0 %v153
    %165 = vmatpush.bf16.msra.mxu0 %v152
    %166 = vmatpush.bf16.msra.mxu0 %v151
    %167 = vmatpush.bf16.msra.mxu0 %v150
    %168 = vmatpush.bf16.msra.mxu0 %v149
    %169 = vmatpush.bf16.msra.mxu0 %v148
    %170 = vmatpush.bf16.msra.mxu0 %v147
    %171 = vmatmul.bf16.gmra.mxu0 %v94
    %v172 = vpop.f32.mrf.mxu0
    %v173 = vadd.f32 %v113, %v172
    %v174 = vpop.f32.mrf.mxu0
    %v175 = vadd.f32 %v113, %v174
    %176 = vdwg.mxu0
    %v177 = vmax.f32 %v173, 0.0
    %v178 = vmax.f32 %v175, 0.0
    %v179 = vpack.c.bf16 %v178, %v177
    %v180 = vld [vmem:[#allocation4] sm:$0xf]
    %v181 = vld [vmem:[#allocation4 + $0x4] sm:$0xf]
    %v182 = vld [vmem:[#allocation4 + $0x8] sm:$0xf]
    %v183 = vld [vmem:[#allocation4 + $0xc] sm:$0xf]
    %v184 = vld [vmem:[#allocation4 + $0x10] sm:$0xf]
    %v185 = vld [vmem:[#allocation4 + $0x14] sm:$0xf]
    %v186 = vld [vmem:[#allocation4 + $0x18] sm:$0xf]
    %v187 = vld [vmem:[#allocation4 + $0x1c] sm:$0xf]
    %v188 = vld [vmem:[#allocation4 + $0x20] sm:$0xf]
    %v189 = vld [vmem:[#allocation4 + $0x24] sm:$0xf]
    %v190 = vld [vmem:[#allocation4 + $0x28] sm:$0xf]
    %v191 = vld [vmem:[#allocation4 + $0x2c] sm:$0xf]
    %v192 = vld [vmem:[#allocation4 + $0x30] sm:$0xf]
    %v193 = vld [vmem:[#allocation4 + $0x34] sm:$0xf]
    %v194 = vld [vmem:[#allocation4 + $0x38] sm:$0xf]
    %v195 = vld [vmem:[#allocation4 + $0x3c] sm:$0xf]
    %v196 = vld [vmem:[%s6] sm:$0x1]
    %v198 = vperm.slane %v196, 0
    %v216 = vunpack.c.l.b16 %v180
    %v217 = vunpack.c.l.b16 %v181
    %v218 = vunpack.c.l.b16 %v182
    %v219 = vunpack.c.l.b16 %v183
    %v220 = vunpack.c.l.b16 %v184
    %v221 = vunpack.c.l.b16 %v185
    %v222 = vunpack.c.l.b16 %v186
    %v223 = vunpack.c.l.b16 %v187
    %v224 = vunpack.c.l.b16 %v188
    %v225 = vunpack.c.l.b16 %v189
    %v226 = vunpack.c.l.b16 %v190
    %v227 = vunpack.c.l.b16 %v191
    %v228 = vunpack.c.l.b16 %v192
    %v229 = vunpack.c.l.b16 %v193
    %v230 = vunpack.c.l.b16 %v194
    %v231 = vunpack.c.l.b16 %v195
    %v232 = vpack.c.b16 %v217, %v216
    %v233 = vpack.c.b16 %v219, %v218
    %v234 = vpack.c.b16 %v221, %v220
    %v235 = vpack.c.b16 %v223, %v222
    %v236 = vpack.c.b16 %v225, %v224
    %v237 = vpack.c.b16 %v227, %v226
    %v238 = vpack.c.b16 %v229, %v228
    %v239 = vpack.c.b16 %v231, %v230
    %248 = vmatpush.bf16.msra.mxu0 %v239
    %249 = vmatpush.bf16.msra.mxu0 %v238
    %250 = vmatpush.bf16.msra.mxu0 %v237
    %251 = vmatpush.bf16.msra.mxu0 %v236
    %252 = vmatpush.bf16.msra.mxu0 %v235
    %253 = vmatpush.bf16.msra.mxu0 %v234
    %254 = vmatpush.bf16.msra.mxu0 %v233
    %255 = vmatpush.bf16.msra.mxu0 %v232
    %256 = vmatmul.bf16.gmra.mxu0 %v179
    %v257 = vpop.f32.mrf.mxu0
    %v258 = vadd.f32 %v198, %v257
    %v259 = vpop.f32.mrf.mxu0
    %v260 = vadd.f32 %v198, %v259
    %261 = vdwg.mxu0
    %262 = vst [vmem:[%s7] sm:$0xff] %v258
    %263 = vst [vmem:[%s7 + $0x8] sm:$0xff] %v260
    // Predicated region
    $region38: #{shared_policy_forward.1} parent=1 // pred_check
      _
    $region39: #{shared_policy_forward.1} parent=1 // pred_check_branch
      %265 = sbr.rel (0) target = $region41
    $region40: #{shared_policy_forward.1} parent=1 // pred_region
      _
    $region41: #{shared_policy_forward.1} parent=1 // pred_fallthru
      _
    // Predicated region
    $region42: #{shared_policy_forward.1} parent=1 // pred_check
      _
    $region43: #{shared_policy_forward.1} parent=1 // pred_check_branch
      %267 = sbr.rel (0) target = $region45
    $region44: #{shared_policy_forward.1} parent=1 // pred_region
      _
    $region45: #{shared_policy_forward.1} parent=1 // pred_fallthru
      _
    %268 = vsyncpa [#allocation3], 1
    %269 = vsyncpa [#allocation5], 1

</llo_original>
